<compile_context>
chip_gen: v5e
topology: v5e:2x2
jax: 0.10.0
libtpu: 0.0.40
codegen_flags: <defaults>
</compile_context>

<pallas_src>
import functools

import jax
import jax.numpy as jnp
from jax.experimental import pallas as pl
from jax.experimental.pallas import tpu as pltpu


def _ce_tile_kernel(x_ref, t_ref, o_ref, *, k, c, tile_rows, valid_rows,
                    needs_mask):
    """One grid step over `tile_rows` packed rows (k samples x c classes each).

    Writes a single per-tile partial loss sum into sublane 0 of an (8, 1)
    output block (other sublanes are zero).
    """
    i = pl.program_id(0)

    per_row = jnp.zeros((tile_rows, 1), jnp.float32)
    # Static (unrolled) loop over the k samples packed along the lane axis.
    for j in range(k):
        sl = slice(j * c, (j + 1) * c)
        xj = x_ref[:, sl].astype(jnp.float32)              # (tile_rows, c)
        tj = t_ref[:, sl]                                   # keep native dtype

        # Numerically-stable per-sample log-sum-exp.
        m = jnp.max(xj, axis=-1, keepdims=True)
        lse = jnp.log(jnp.sum(jnp.exp(xj - m), axis=-1, keepdims=True))
        # f32 accumulation without materializing an f32 copy of the t tile.
        t_sum = jnp.sum(tj, axis=-1, keepdims=True, dtype=jnp.float32)
        tx_sum = jnp.sum(tj * xj, axis=-1, keepdims=True, dtype=jnp.float32)

        # sum_c(-t * (x - m - lse)) == (m + lse) * sum_c(t) - sum_c(t * x)
        per_row = per_row + (m + lse) * t_sum - tx_sum

    if needs_mask:
        # Rows past the real (packed) batch are overhang garbage (possibly
        # NaN); zero them BEFORE the tile reduction so nothing leaks in.
        row_id = (jax.lax.broadcasted_iota(jnp.int32, (tile_rows, 1), 0)
                  + i * tile_rows)
        per_row = jnp.where(row_id < valid_rows, per_row, jnp.float32(0.0))

    tile_sum = jnp.sum(per_row)                             # XLU sublane reduce
    out_row = jax.lax.broadcasted_iota(jnp.int32, (8, 1), 0)
    o_ref[...] = jnp.where(out_row == 0, tile_sum, jnp.float32(0.0))


def _vmem_limit_bytes():
    """Generation-aware scoped-VMEM limit (v7x has only 64 MiB per TC)."""
    try:
        cap = int(pltpu.get_tpu_info().vmem_capacity_bytes)
    except Exception:
        cap = 64 << 20  # conservative default (v7x per-TC VMEM)
    return (40 << 20) if cap <= (64 << 20) else (48 << 20)


def one_hot_label_ce_loss(x, target, *, target_block_bytes=1 << 20):
    """x, target: [..., C]; returns scalar f32 mean cross-entropy loss."""
    C = x.shape[-1]
    x2 = x.reshape(-1, C)
    t2 = target.reshape(-1, C)
    B = x2.shape[0]

    # Lane packing: fold k consecutive samples into one 128-lane row when the
    # class axis is narrow.  Row-major reshape is free (no HBM copy).
    k = 128 // C if (C < 128 and 128 % C == 0) else 1
    if k > 1 and (B % k != 0 or k > 16):
        k = 1  # odd batch (or huge unroll) -> fall back to unpacked path
    rows, width = B // k, k * C
    xp = x2.reshape(rows, width)
    tp = t2.reshape(rows, width)

    # Tile sizing by bytes: budget with the lane-padded width and f32 itemsize
    # so bf16 inputs leave room for their f32 intermediates.  ~1 MiB blocks
    # already sit at ~85% of the HBM roofline; cap rows to bound the
    # lane-padded (tile_rows, 1) column temporaries.
    lane_w = ((width + 127) // 128) * 128
    tile_rows = target_block_bytes // (lane_w * 4)
    tile_rows = int(max(8, min((tile_rows // 8) * 8, 4096)))
    tile_rows = min(tile_rows, ((rows + 7) // 8) * 8)

    num_tiles = pl.cdiv(rows, tile_rows)
    needs_mask = (num_tiles * tile_rows) != rows

    kernel = functools.partial(_ce_tile_kernel, k=k, c=C, tile_rows=tile_rows,
                               valid_rows=rows, needs_mask=needs_mask)

    in_bytes = (jnp.dtype(x2.dtype).itemsize + jnp.dtype(t2.dtype).itemsize)
    cost = pl.CostEstimate(
        flops=5 * B * C,
        transcendentals=B * C + B,
        bytes_accessed=B * C * in_bytes + num_tiles * 8 * 4,
    )

    # TODO(synk): for vocab-scale C add a class-axis grid dim ("arbitrary",
    # placed last) with an online-softmax carry so a single block never has
    # to span the whole class axis.
    per_tile = pl.pallas_call(
        kernel,
        out_shape=jax.ShapeDtypeStruct((num_tiles * 8, 1), jnp.float32),
        grid_spec=pl.GridSpec(
            grid=(num_tiles,),
            in_specs=[
                pl.BlockSpec((tile_rows, width), lambda i: (i, 0)),
                pl.BlockSpec((tile_rows, width), lambda i: (i, 0)),
            ],
            out_specs=pl.BlockSpec((8, 1), lambda i: (i, 0)),
        ),
        compiler_params=pltpu.CompilerParams(
            # No carried state -> batch tiles are independent (megacore-able).
            dimension_semantics=("parallel",),
            vmem_limit_bytes=_vmem_limit_bytes(),
        ),
        cost_estimate=cost,
    )(xp, tp)

    # Tiny final reduction in plain JAX (non-scalar sublanes are zeros).
    return jnp.sum(per_tile) / jnp.float32(B)


def _reference(x, target):
    x2 = x.reshape(-1, x.shape[-1]).astype(jnp.float32)
    t2 = target.reshape(-1, target.shape[-1]).astype(jnp.float32)
    return jnp.mean(jnp.sum(-t2 * jax.nn.log_softmax(x2, axis=-1), axis=-1))


def _make_case(key, shape):
    kx, kt = jax.random.split(key)
    x = jax.random.normal(kx, shape, dtype=jnp.float32)
    t_raw = jax.random.uniform(kt, shape, dtype=jnp.float32)
    t = t_raw / jnp.sum(t_raw, axis=-1, keepdims=True)
    return x, t


if __name__ == "__main__":
    key = jax.random.PRNGKey(0)
    k1, k2, k3, k4 = jax.random.split(key, 4)

    # 1) Packed path (C=32 -> k=4), single overhanging tile with row mask.
    x, t = _make_case(k1, (16, 32))
    loss = jax.block_until_ready(one_hot_label_ce_loss(x, t))
    ref = _reference(x, t)
    assert jnp.allclose(loss, ref, rtol=1e-5, atol=1e-5), (loss, ref)

    # 2) Uneven batch (B % k != 0) -> unpacked fallback + row mask.
    x, t = _make_case(k2, (13, 32))
    loss = jax.block_until_ready(one_hot_label_ce_loss(x, t))
    ref = _reference(x, t)
    assert jnp.allclose(loss, ref, rtol=1e-5, atol=1e-5), (loss, ref)

    # 3) Leading dims flattened (2, 8, 64) -> packed with k=2.
    x, t = _make_case(k3, (2, 8, 64))
    loss = jax.block_until_ready(one_hot_label_ce_loss(x, t))
    ref = _reference(x, t)
    assert jnp.allclose(loss, ref, rtol=1e-5, atol=1e-5), (loss, ref)

    # 4) Multi-tile grid + per-tile scalar outputs (tiny forced block size).
    x, t = _make_case(k4, (40, 32))
    loss = jax.block_until_ready(
        one_hot_label_ce_loss(x, t, target_block_bytes=4096))
    ref = _reference(x, t)
    assert jnp.allclose(loss, ref, rtol=1e-5, atol=1e-5), (loss, ref)

    print("KERNEL_OK")
</pallas_src>

<mosaic_0001>
module attributes {stable_mosaic.version = 11 : i64} {
  func.func @_ce_tile_kernel(%arg0: i32, %arg1: memref<8x128xf32, #tpu.memory_space<vmem>>, %arg2: memref<8x128xf32, #tpu.memory_space<vmem>>, %arg3: memref<8x1xf32, #tpu.memory_space<vmem>>) attributes {dimension_semantics = [#tpu.dimension_semantics<parallel>], iteration_bounds = array<i64: 1>, scalar_prefetch = 0 : i64, scratch_operands = 0 : i64, tpu.core_type = #tpu.core_type<tc>, window_params = [{transform_indices = @transform_0, window_bounds = array<i64: 8, 128>}, {transform_indices = @transform_1, window_bounds = array<i64: 8, 128>}, {transform_indices = @transform_2, window_bounds = array<i64: 8, 1>}]} {
    %cst = arith.constant 0.000000e+00 : f32
    %0 = vector.broadcast %cst : f32 to vector<8x1xf32>
    %c0 = arith.constant 0 : index
    %c0_0 = arith.constant 0 : index
    %1 = vector.load %arg1[%c0, %c0_0] : memref<8x128xf32, #tpu.memory_space<vmem>>, vector<8x32xf32>
    %c0_1 = arith.constant 0 : index
    %c0_2 = arith.constant 0 : index
    %2 = vector.load %arg2[%c0_1, %c0_2] : memref<8x128xf32, #tpu.memory_space<vmem>>, vector<8x32xf32>
    %cst_3 = arith.constant dense<0xFF800000> : vector<8xf32>
    %3 = vector.multi_reduction <maximumf>, %1, %cst_3 [1] : vector<8x32xf32> to vector<8xf32>
    %4 = vector.shape_cast %3 : vector<8xf32> to vector<8x1xf32>
    %5 = vector.broadcast %4 : vector<8x1xf32> to vector<8x32xf32>
    %6 = arith.subf %1, %5 : vector<8x32xf32>
    %7 = math.exp %6 : vector<8x32xf32>
    %cst_4 = arith.constant dense<0.000000e+00> : vector<8xf32>
    %8 = vector.multi_reduction <add>, %7, %cst_4 [1] : vector<8x32xf32> to vector<8xf32>
    %9 = vector.shape_cast %8 : vector<8xf32> to vector<8x1xf32>
    %10 = math.log %9 : vector<8x1xf32>
    %cst_5 = arith.constant dense<0.000000e+00> : vector<8xf32>
    %11 = vector.multi_reduction <add>, %2, %cst_5 [1] : vector<8x32xf32> to vector<8xf32>
    %12 = vector.shape_cast %11 : vector<8xf32> to vector<8x1xf32>
    %13 = arith.mulf %2, %1 : vector<8x32xf32>
    %cst_6 = arith.constant dense<0.000000e+00> : vector<8xf32>
    %14 = vector.multi_reduction <add>, %13, %cst_6 [1] : vector<8x32xf32> to vector<8xf32>
    %15 = vector.shape_cast %14 : vector<8xf32> to vector<8x1xf32>
    %16 = arith.addf %4, %10 : vector<8x1xf32>
    %17 = arith.mulf %16, %12 : vector<8x1xf32>
    %18 = arith.addf %0, %17 : vector<8x1xf32>
    %19 = arith.subf %18, %15 : vector<8x1xf32>
    %c0_7 = arith.constant 0 : index
    %c32 = arith.constant 32 : index
    %20 = vector.load %arg1[%c0_7, %c32] : memref<8x128xf32, #tpu.memory_space<vmem>>, vector<8x32xf32>
    %c0_8 = arith.constant 0 : index
    %c32_9 = arith.constant 32 : index
    %21 = vector.load %arg2[%c0_8, %c32_9] : memref<8x128xf32, #tpu.memory_space<vmem>>, vector<8x32xf32>
    %cst_10 = arith.constant dense<0xFF800000> : vector<8xf32>
    %22 = vector.multi_reduction <maximumf>, %20, %cst_10 [1] : vector<8x32xf32> to vector<8xf32>
    %23 = vector.shape_cast %22 : vector<8xf32> to vector<8x1xf32>
    %24 = vector.broadcast %23 : vector<8x1xf32> to vector<8x32xf32>
    %25 = arith.subf %20, %24 : vector<8x32xf32>
    %26 = math.exp %25 : vector<8x32xf32>
    %cst_11 = arith.constant dense<0.000000e+00> : vector<8xf32>
    %27 = vector.multi_reduction <add>, %26, %cst_11 [1] : vector<8x32xf32> to vector<8xf32>
    %28 = vector.shape_cast %27 : vector<8xf32> to vector<8x1xf32>
    %29 = math.log %28 : vector<8x1xf32>
    %cst_12 = arith.constant dense<0.000000e+00> : vector<8xf32>
    %30 = vector.multi_reduction <add>, %21, %cst_12 [1] : vector<8x32xf32> to vector<8xf32>
    %31 = vector.shape_cast %30 : vector<8xf32> to vector<8x1xf32>
    %32 = arith.mulf %21, %20 : vector<8x32xf32>
    %cst_13 = arith.constant dense<0.000000e+00> : vector<8xf32>
    %33 = vector.multi_reduction <add>, %32, %cst_13 [1] : vector<8x32xf32> to vector<8xf32>
    %34 = vector.shape_cast %33 : vector<8xf32> to vector<8x1xf32>
    %35 = arith.addf %23, %29 : vector<8x1xf32>
    %36 = arith.mulf %35, %31 : vector<8x1xf32>
    %37 = arith.addf %19, %36 : vector<8x1xf32>
    %38 = arith.subf %37, %34 : vector<8x1xf32>
    %c0_14 = arith.constant 0 : index
    %c64 = arith.constant 64 : index
    %39 = vector.load %arg1[%c0_14, %c64] : memref<8x128xf32, #tpu.memory_space<vmem>>, vector<8x32xf32>
    %c0_15 = arith.constant 0 : index
    %c64_16 = arith.constant 64 : index
    %40 = vector.load %arg2[%c0_15, %c64_16] : memref<8x128xf32, #tpu.memory_space<vmem>>, vector<8x32xf32>
    %cst_17 = arith.constant dense<0xFF800000> : vector<8xf32>
    %41 = vector.multi_reduction <maximumf>, %39, %cst_17 [1] : vector<8x32xf32> to vector<8xf32>
    %42 = vector.shape_cast %41 : vector<8xf32> to vector<8x1xf32>
    %43 = vector.broadcast %42 : vector<8x1xf32> to vector<8x32xf32>
    %44 = arith.subf %39, %43 : vector<8x32xf32>
    %45 = math.exp %44 : vector<8x32xf32>
    %cst_18 = arith.constant dense<0.000000e+00> : vector<8xf32>
    %46 = vector.multi_reduction <add>, %45, %cst_18 [1] : vector<8x32xf32> to vector<8xf32>
    %47 = vector.shape_cast %46 : vector<8xf32> to vector<8x1xf32>
    %48 = math.log %47 : vector<8x1xf32>
    %cst_19 = arith.constant dense<0.000000e+00> : vector<8xf32>
    %49 = vector.multi_reduction <add>, %40, %cst_19 [1] : vector<8x32xf32> to vector<8xf32>
    %50 = vector.shape_cast %49 : vector<8xf32> to vector<8x1xf32>
    %51 = arith.mulf %40, %39 : vector<8x32xf32>
    %cst_20 = arith.constant dense<0.000000e+00> : vector<8xf32>
    %52 = vector.multi_reduction <add>, %51, %cst_20 [1] : vector<8x32xf32> to vector<8xf32>
    %53 = vector.shape_cast %52 : vector<8xf32> to vector<8x1xf32>
    %54 = arith.addf %42, %48 : vector<8x1xf32>
    %55 = arith.mulf %54, %50 : vector<8x1xf32>
    %56 = arith.addf %38, %55 : vector<8x1xf32>
    %57 = arith.subf %56, %53 : vector<8x1xf32>
    %c0_21 = arith.constant 0 : index
    %c96 = arith.constant 96 : index
    %58 = vector.load %arg1[%c0_21, %c96] : memref<8x128xf32, #tpu.memory_space<vmem>>, vector<8x32xf32>
    %c0_22 = arith.constant 0 : index
    %c96_23 = arith.constant 96 : index
    %59 = vector.load %arg2[%c0_22, %c96_23] : memref<8x128xf32, #tpu.memory_space<vmem>>, vector<8x32xf32>
    %cst_24 = arith.constant dense<0xFF800000> : vector<8xf32>
    %60 = vector.multi_reduction <maximumf>, %58, %cst_24 [1] : vector<8x32xf32> to vector<8xf32>
    %61 = vector.shape_cast %60 : vector<8xf32> to vector<8x1xf32>
    %62 = vector.broadcast %61 : vector<8x1xf32> to vector<8x32xf32>
    %63 = arith.subf %58, %62 : vector<8x32xf32>
    %64 = math.exp %63 : vector<8x32xf32>
    %cst_25 = arith.constant dense<0.000000e+00> : vector<8xf32>
    %65 = vector.multi_reduction <add>, %64, %cst_25 [1] : vector<8x32xf32> to vector<8xf32>
    %66 = vector.shape_cast %65 : vector<8xf32> to vector<8x1xf32>
    %67 = math.log %66 : vector<8x1xf32>
    %cst_26 = arith.constant dense<0.000000e+00> : vector<8xf32>
    %68 = vector.multi_reduction <add>, %59, %cst_26 [1] : vector<8x32xf32> to vector<8xf32>
    %69 = vector.shape_cast %68 : vector<8xf32> to vector<8x1xf32>
    %70 = arith.mulf %59, %58 : vector<8x32xf32>
    %cst_27 = arith.constant dense<0.000000e+00> : vector<8xf32>
    %71 = vector.multi_reduction <add>, %70, %cst_27 [1] : vector<8x32xf32> to vector<8xf32>
    %72 = vector.shape_cast %71 : vector<8xf32> to vector<8x1xf32>
    %73 = arith.addf %61, %67 : vector<8x1xf32>
    %74 = arith.mulf %73, %69 : vector<8x1xf32>
    %75 = arith.addf %57, %74 : vector<8x1xf32>
    %76 = arith.subf %75, %72 : vector<8x1xf32>
    %77 = tpu.iota {dimensions = array<i32: 0>} : vector<8x1xi32>
    %c8_i32 = arith.constant 8 : i32
    %78 = arith.muli %arg0, %c8_i32 : i32
    %79 = vector.broadcast %78 : i32 to vector<8x1xi32>
    %80 = arith.addi %77, %79 : vector<8x1xi32>
    %c4_i32 = arith.constant 4 : i32
    %81 = vector.broadcast %c4_i32 : i32 to vector<8x1xi32>
    %82 = arith.cmpi slt, %80, %81 : vector<8x1xi32>
    %cst_28 = arith.constant 0.000000e+00 : f32
    %83 = vector.broadcast %cst_28 : f32 to vector<8x1xf32>
    %84 = arith.select %82, %76, %83 : vector<8x1xi1>, vector<8x1xf32>
    %85 = vector.shape_cast %84 : vector<8x1xf32> to vector<1x8x1xf32>
    %cst_29 = arith.constant dense<0.000000e+00> : vector<1xf32>
    %86 = vector.multi_reduction <add>, %85, %cst_29 [1, 2] : vector<1x8x1xf32> to vector<1xf32>
    %87 = vector.shape_cast %86 : vector<1xf32> to vector<1x1x1xf32>
    %88 = vector.extract %87[0, 0, 0] : f32 from vector<1x1x1xf32>
    %89 = tpu.iota {dimensions = array<i32: 0>} : vector<8x1xi32>
    %c0_i32 = arith.constant 0 : i32
    %90 = vector.broadcast %c0_i32 : i32 to vector<8x1xi32>
    %91 = arith.cmpi eq, %89, %90 : vector<8x1xi32>
    %cst_30 = arith.constant 0.000000e+00 : f32
    %92 = vector.broadcast %88 : f32 to vector<8x1xf32>
    %93 = vector.broadcast %cst_30 : f32 to vector<8x1xf32>
    %94 = arith.select %91, %92, %93 : vector<8x1xi1>, vector<8x1xf32>
    %c0_31 = arith.constant 0 : index
    %c0_32 = arith.constant 0 : index
    %95 = vector.load %arg3[%c0_31, %c0_32] : memref<8x1xf32, #tpu.memory_space<vmem>>, vector<8x1xf32>
    tpu.vector_store %arg3[%c0_31, %c0_32], %94 {strides = array<i32>} : memref<8x1xf32, #tpu.memory_space<vmem>>, vector<8x1xf32>,
    return
  }
  func.func @transform_0(%arg0: i32) -> (i32, i32) {
    %c0_i32 = arith.constant 0 : i32
    %c0_i32_0 = arith.constant 0 : i32
    return %arg0, %c0_i32 : i32, i32
  }
  func.func @transform_1(%arg0: i32) -> (i32, i32) {
    %c0_i32 = arith.constant 0 : i32
    %c0_i32_0 = arith.constant 0 : i32
    return %arg0, %c0_i32 : i32, i32
  }
  func.func @transform_2(%arg0: i32) -> (i32, i32) {
    %c0_i32 = arith.constant 0 : i32
    %c0_i32_0 = arith.constant 0 : i32
    return %arg0, %c0_i32 : i32, i32
  }
}

</mosaic_0001>

<llo_original>
// kernel: tpu_custom_call.1
$region0: #{tpu_custom_call.1}
  #allocation0 [shape = 'u32[]', space=smem, size = 0x4, offset = 0x4, fixed_abs, tag = 'smem constant byte address 0x4 - core index']
  #allocation1 [shape = 'u32[72,128]{1,0:T(1,128)}', space=vmem, size = 0x9000, scoped, tag = 'internal scratch']
  %s0 = inlined_call_operand.hbm [shape: f32[4,128], index: 0, kind: input, shape index: {}]
  %s1 = inlined_call_operand.hbm [shape: f32[4,128], index: 1, kind: input, shape index: {}]
  %s2 = inlined_call_operand.vmem [shape: f32[8,1], index: 2, kind: output, shape index: {}]
  %s3 = sld [smem:[#allocation0]]
  $region26: #{tpu_custom_call.1} parent=0
    _
  %s5 = ssub.s32 1, %s3
  %s6 = scalar_select 0, %s5, %s3
  $region1: #{tpu_custom_call.1} parent=0
    #allocation2 [shape = 'u8[4096]{0}', space=vmem, size = 0x1000, scoped, tag = 'input window, operand 0, single buffered']
    #allocation3 [shape = 's32[1]{0}', space=sflag, size = 0x4, scoped, tag = 'scoped memory for tpu_custom_call.1']
    #allocation4 [shape = 'u8[4096]{0}', space=vmem, size = 0x1000, scoped, tag = 'input window, operand 1, single buffered']
    #allocation5 [shape = 's32[1]{0}', space=sflag, size = 0x4, scoped, tag = 'scoped memory for tpu_custom_call.1']
    %7 = vsyncpa [#allocation3], 0
    %8 = vsyncpa [#allocation5], 0
    // Predicated region
    $region2: #{tpu_custom_call.1} parent=1 // pred_check
      _
    $region3: #{tpu_custom_call.1} parent=1 // pred_check_branch
      %10 = sbr.rel (0) target = $region5
    $region4: #{tpu_custom_call.1} parent=1 // pred_region
      %12 = vsyncadd [#allocation3], 64
      %s13 = sshll.u32 %s0, 4
      %s14 = int_to_ptr.hbm [resolvable:$true] %s13
      %s15 = sshll.u32 [#allocation2], 4
      %s16 = int_to_ptr.vmem [resolvable:$true] %s15
      %21 = dma.hbm_to_vmem [thread:$0]  %s14, 64, %s16, [#allocation3], 64, 64, 4
    $region5: #{tpu_custom_call.1} parent=1 // pred_fallthru
      _
    // Predicated region
    $region6: #{tpu_custom_call.1} parent=1 // pred_check
      _
    $region7: #{tpu_custom_call.1} parent=1 // pred_check_branch
      %23 = sbr.rel (0) target = $region9
    $region8: #{tpu_custom_call.1} parent=1 // pred_region
      %25 = vsyncadd [#allocation5], 64
      %s26 = sshll.u32 %s1, 4
      %s27 = int_to_ptr.hbm [resolvable:$true] %s26
      %s28 = sshll.u32 [#allocation4], 4
      %s29 = int_to_ptr.vmem [resolvable:$true] %s28
      %34 = dma.hbm_to_vmem [thread:$0]  %s27, 64, %s29, [#allocation5], 64, 64, 4
    $region9: #{tpu_custom_call.1} parent=1 // pred_fallthru
      _
    // Predicated region
    $region10: #{tpu_custom_call.1} parent=1 // pred_check
      _
    $region11: #{tpu_custom_call.1} parent=1 // pred_check_branch
      %36 = sbr.rel (0) target = $region13
    $region12: #{tpu_custom_call.1} parent=1 // pred_region
      %38 = dma.done [#allocation3], 128
    $region13: #{tpu_custom_call.1} parent=1 // pred_fallthru
      _
    // Predicated region
    $region14: #{tpu_custom_call.1} parent=1 // pred_check
      _
    $region15: #{tpu_custom_call.1} parent=1 // pred_check_branch
      %40 = sbr.rel (0) target = $region17
    $region16: #{tpu_custom_call.1} parent=1 // pred_region
      %42 = dma.done [#allocation5], 128
    $region17: #{tpu_custom_call.1} parent=1 // pred_fallthru
      _
    %v43 = vld [vmem:[#allocation2] sm:$0xff]
    %v44 = vld [vmem:[#allocation4] sm:$0xff]
    %vm45 = vcmask 261120
    %v46 = vsel %vm45, %v43, -inf
    %47 = vmax.xlane.f32.xlu0 %v46
    %v48 = vpop.xlane.xlu0 %47
    %v49 = vsub.f32 %v43, %v48
    %v50 = vmul.f32 %v49, 1.442695
    %v51 = vpow.pop %v50
    %v52 = vsel %vm45, %v51, 0.0
    %53 = vadd.xlane.f32.xlu0 %v52
    %v54 = vpop.xlane.xlu0 %53
    %v55 = vlog2.pop %v54
    %v56 = vmul.f32 %v55, 0.6931472
    %v57 = vsel %vm45, %v44, 0.0
    %58 = vadd.xlane.f32.xlu0 %v57
    %v59 = vpop.xlane.xlu0 %58
    %v60 = vmul.f32 %v44, %v43
    %v61 = vsel %vm45, %v60, 0.0
    %62 = vadd.xlane.f32.xlu0 %v61
    %v63 = vpop.xlane.xlu0 %62
    %v64 = vadd.f32 %v48, %v56
    %v65 = vmul.f32 %v64, %v59
    %v66 = vadd.f32 %v65, 0.0
    %v67 = vsub.f32 %v66, %v63
    %vm68 = vcmask 523520
    %v69 = vsel %vm68, %v43, -inf
    %70 = vmax.xlane.f32.xlu0 %v69
    %v71 = vpop.xlane.xlu0 %70
    %v72 = vsub.f32 %v43, %v71
    %v73 = vmul.f32 %v72, 1.442695
    %v74 = vpow.pop %v73
    %76 = vrot.lane.b32.xlu0 %v74, 96
    %v77 = vpop.permute.xlu0 %76
    %v79 = vsel %vm45, %v77, 0.0
    %80 = vadd.xlane.f32.xlu0 %v79
    %v81 = vpop.xlane.xlu0 %80
    %v82 = vlog2.pop %v81
    %v83 = vmul.f32 %v82, 0.6931472
    %85 = vrot.lane.b32.xlu0 %v44, 96
    %v86 = vpop.permute.xlu0 %85
    %v88 = vsel %vm45, %v86, 0.0
    %89 = vadd.xlane.f32.xlu0 %v88
    %v90 = vpop.xlane.xlu0 %89
    %92 = vrot.lane.b32.xlu0 %v60, 96
    %v93 = vpop.permute.xlu0 %92
    %v95 = vsel %vm45, %v93, 0.0
    %96 = vadd.xlane.f32.xlu0 %v95
    %v97 = vpop.xlane.xlu0 %96
    %v98 = vadd.f32 %v71, %v83
    %v99 = vmul.f32 %v98, %v90
    %v100 = vadd.f32 %v67, %v99
    %v101 = vsub.f32 %v100, %v97
    %vm102 = vcmask 785920
    %v103 = vsel %vm102, %v43, -inf
    %104 = vmax.xlane.f32.xlu0 %v103
    %v105 = vpop.xlane.xlu0 %104
    %v106 = vsub.f32 %v43, %v105
    %v107 = vmul.f32 %v106, 1.442695
    %v108 = vpow.pop %v107
    %110 = vrot.lane.b32.xlu0 %v108, 64
    %v111 = vpop.permute.xlu0 %110
    %v113 = vsel %vm45, %v111, 0.0
    %114 = vadd.xlane.f32.xlu0 %v113
    %v115 = vpop.xlane.xlu0 %114
    %v116 = vlog2.pop %v115
    %v117 = vmul.f32 %v116, 0.6931472
    %118 = vrot.lane.b32.xlu0 %v44, 64
    %v119 = vpop.permute.xlu0 %118
    %v121 = vsel %vm45, %v119, 0.0
    %122 = vadd.xlane.f32.xlu0 %v121
    %v123 = vpop.xlane.xlu0 %122
    %124 = vrot.lane.b32.xlu0 %v60, 64
    %v125 = vpop.permute.xlu0 %124
    %v127 = vsel %vm45, %v125, 0.0
    %128 = vadd.xlane.f32.xlu0 %v127
    %v129 = vpop.xlane.xlu0 %128
    %v130 = vadd.f32 %v105, %v117
    %v131 = vmul.f32 %v130, %v123
    %v132 = vadd.f32 %v101, %v131
    %v133 = vsub.f32 %v132, %v129
    %vm134 = vcmask 1048320
    %v135 = vsel %vm134, %v43, -inf
    %136 = vmax.xlane.f32.xlu0 %v135
    %v137 = vpop.xlane.xlu0 %136
    %v138 = vsub.f32 %v43, %v137
    %v139 = vmul.f32 %v138, 1.442695
    %v140 = vpow.pop %v139
    %142 = vrot.lane.b32.xlu0 %v140, 32
    %v143 = vpop.permute.xlu0 %142
    %v145 = vsel %vm45, %v143, 0.0
    %146 = vadd.xlane.f32.xlu0 %v145
    %v147 = vpop.xlane.xlu0 %146
    %v148 = vlog2.pop %v147
    %v149 = vmul.f32 %v148, 0.6931472
    %150 = vrot.lane.b32.xlu0 %v44, 32
    %v151 = vpop.permute.xlu0 %150
    %v153 = vsel %vm45, %v151, 0.0
    %154 = vadd.xlane.f32.xlu0 %v153
    %v155 = vpop.xlane.xlu0 %154
    %156 = vrot.lane.b32.xlu0 %v60, 32
    %v157 = vpop.permute.xlu0 %156
    %v159 = vsel %vm45, %v157, 0.0
    %160 = vadd.xlane.f32.xlu0 %v159
    %v161 = vpop.xlane.xlu0 %160
    %v162 = vadd.f32 %v137, %v149
    %v163 = vmul.f32 %v162, %v155
    %v164 = vadd.f32 %v133, %v163
    %v165 = vsub.f32 %v164, %v161
    %v166 = vlaneseq
    %v167 = vshrl.u32 %v166, 7
    %s168 = smul.u32 0, 8
    %v169 = vstv %s168
    %v170 = vadd.s32 %v167, %v169
    %vm171 = vcmp.lt.s32.totalorder %v170, 4
    %v172 = vsel %vm171, %v165, 0.0
    %vm173 = vcmask 7168
    %v174 = vsel %vm173, %v172, 0.0
    %175 = vadd.xlane.f32.xlu0 %v174
    %v176 = vpop.xlane.xlu0 %175
    %v177 = vrot.slane %v176, 4
    %v178 = vadd.f32 %v176, %v177
    %v179 = vrot.slane %v178, 2
    %v180 = vadd.f32 %v178, %v179
    %v181 = vrot.slane %v180, 1
    %v182 = vadd.f32 %v180, %v181
    %s183 = vtos %v182
    %vm184 = vcmp.eq.s32.totalorder %v167, 0
    %v185 = vstv %s183
    %v186 = vsel %vm184, %v185, 0.0
    %187 = vst.msk [vmem:[%s2] sm:$0xff] %vm173, %v186
    // Predicated region
    $region18: #{tpu_custom_call.1} parent=1 // pred_check
      _
    $region19: #{tpu_custom_call.1} parent=1 // pred_check_branch
      %189 = sbr.rel (0) target = $region21
    $region20: #{tpu_custom_call.1} parent=1 // pred_region
      _
    $region21: #{tpu_custom_call.1} parent=1 // pred_fallthru
      _
    // Predicated region
    $region22: #{tpu_custom_call.1} parent=1 // pred_check
      _
    $region23: #{tpu_custom_call.1} parent=1 // pred_check_branch
      %191 = sbr.rel (0) target = $region25
    $region24: #{tpu_custom_call.1} parent=1 // pred_region
      _
    $region25: #{tpu_custom_call.1} parent=1 // pred_fallthru
      _
    %192 = vsyncpa [#allocation3], 1
    %193 = vsyncpa [#allocation5], 1

</llo_original>
